<compile_context>
chip_gen: v7x
topology: tpu7x:2x2x1
jax: 0.10.0
libtpu: 0.0.40
codegen_flags: <defaults>
</compile_context>

<pallas_src>
import functools
import math

import jax
import jax.numpy as jnp
from jax.experimental import pallas as pl
from jax.experimental.pallas import tpu as pltpu

_INV_SQRT2 = 0.7071067811865476          # 1/sqrt(2) for exact (erf) GELU
_HAS_BUFFERED = hasattr(pl, "Buffered")  # single-buffer resident weights if possible


def _round_up(x, m):
    return ((x + m - 1) // m) * m


def _cdiv(a, b):
    return -(-a // b)


@functools.lru_cache(maxsize=None)
def _vmem_budgets():
    """(tile-chooser budget, compiler vmem_limit_bytes) — generation-aware."""
    try:
        cap = int(pltpu.get_tpu_info().vmem_capacity_bytes)
        if cap <= 0:
            raise ValueError("bad vmem capacity")
    except Exception:
        cap = 64 * 1024 * 1024           # conservative default (v7x-sized), safe everywhere
    limit = min(cap - 8 * 1024 * 1024, 112 * 1024 * 1024)   # 112 MiB v5e/v6e, 56 MiB v7x
    budget = limit - 8 * 1024 * 1024     # headroom for compiler internal scratch
    return budget, limit


def _const_spec(shape, index_map):
    """BlockSpec for a VMEM-resident operand (constant index_map)."""
    if _HAS_BUFFERED:
        return pl.BlockSpec(shape, index_map, pipeline_mode=pl.Buffered(1))
    return pl.BlockSpec(shape, index_map)


def _gelu_exact(h):
    # Exact (erf-based) GELU, matching nn.GELU() default (approximate='none').
    return 0.5 * h * (1.0 + jax.lax.erf(h * jnp.float32(_INV_SQRT2)))


# --------------------------------------------------------------------------- #
# Kernels
# --------------------------------------------------------------------------- #
def _mlp_fused_kernel(x_ref, w1_ref, b1_ref, w2_ref, b2_ref, o_ref):
    """Per row tile: (x @ W1 + b1) -> GELU -> (@ W2 + b2). Weights VMEM-resident."""
    h = jnp.dot(x_ref[...], w1_ref[...], preferred_element_type=jnp.float32)
    h = _gelu_exact(h + b1_ref[...].astype(jnp.float32))
    # TODO(synk): training-mode Dropout(0.2) (PRNG mask + 1/(1-p) scale) omitted;
    # eval mode makes dropout the identity.
    y = jnp.dot(h.astype(w2_ref.dtype), w2_ref[...],
                preferred_element_type=jnp.float32)
    o_ref[...] = (y + b2_ref[...].astype(jnp.float32)).astype(o_ref.dtype)


def _mlp_ktiled_kernel(x_ref, w1_ref, b1_ref, w2_ref, b2_ref, o_ref, acc_ref):
    """Fallback for huge weights: stream hidden-dim tiles, accumulate in f32."""
    k = pl.program_id(1)

    @pl.when(k == 0)
    def _():
        acc_ref[...] = jnp.zeros_like(acc_ref)

    h = jnp.dot(x_ref[...], w1_ref[...], preferred_element_type=jnp.float32)
    h = _gelu_exact(h + b1_ref[...].astype(jnp.float32))
    acc_ref[...] += jnp.dot(h.astype(w2_ref.dtype), w2_ref[...],
                            preferred_element_type=jnp.float32)

    @pl.when(k == pl.num_programs(1) - 1)
    def _():
        o_ref[...] = (acc_ref[...] + b2_ref[...].astype(jnp.float32)
                      ).astype(o_ref.dtype)


# --------------------------------------------------------------------------- #
# Tiling heuristics
# --------------------------------------------------------------------------- #
def _row_tile(avail_bytes, per_row_bytes, n8):
    """Row tile: large (cap 2048, 256-aligned), megacore-balanced, low pad waste."""
    tm = max(8, min(2048, int(avail_bytes) // max(1, int(per_row_bytes))))
    tm = min(tm, n8)
    if tm >= 256:
        tm = (tm // 256) * 256           # fill the MXU M dimension
    else:
        tm = max(8, (tm // 8) * 8)
    # Megacore balance (v7x has 2 TensorCores): give the parallel axis >= 2 steps.
    if n8 > 8 and _cdiv(n8, tm) < 2:
        tm = max(8, _round_up(_cdiv(n8, 2), 8))
    # Bound zero-row padding waste to <= ~25% of the real rows.
    while tm > 8:
        pad = _round_up(n8, tm) - n8
        if pad * 4 <= n8:
            break
        tm = max(8, ((tm // 2) // 8) * 8)
    return tm


# --------------------------------------------------------------------------- #
# Wrapper
# --------------------------------------------------------------------------- #
@functools.partial(jax.jit, static_argnames=("training",))
def mlp_forward(x, w1, b1, w2, b2, *, training=False):
    """x: [..., in_channels]; w1: [in, dim]; b1: [dim]/[1,dim]; w2: [dim, out]; b2: [out]/[1,out]."""
    if training:
        raise NotImplementedError(
            "TODO(synk): training-mode Dropout(0.2) not implemented; "
            "this kernel is eval-mode only (dropout = identity).")

    in_c = x.shape[-1]
    dim = w1.shape[1]
    out_c = w2.shape[1]
    lead = x.shape[:-1]
    n = int(math.prod(lead))

    b1 = b1.reshape(1, dim)
    b2 = b2.reshape(1, out_c)
    x2d = x.reshape(n, in_c)

    itemsize = jnp.dtype(x.dtype).itemsize
    budget, vmem_limit = _vmem_budgets()
    n8 = _round_up(max(n, 8), 8)

    wbuf = 1 if _HAS_BUFFERED else 2
    full_w_bytes = wbuf * (in_c * dim + dim * out_c + dim + out_c) * itemsize
    per_row_fused = 2 * (in_c + out_c) * itemsize + dim * 4  # x/out 2-buffered + f32 hidden
    fused = full_w_bytes + min(128, n8) * per_row_fused <= budget

    if fused:
        # ---------------- common path: weights fully VMEM-resident ----------------
        tm = _row_tile(budget - full_w_bytes, per_row_fused, n8)
        n_pad = _round_up(n8, tm)
        if n_pad != n:  # only copy x when row padding is actually required
            x2d = jnp.zeros((n_pad, in_c), x.dtype).at[:n].set(x2d)

        cost = pl.CostEstimate(
            flops=2 * n_pad * dim * (in_c + out_c),
            transcendentals=n_pad * dim,
            bytes_accessed=(n_pad * (in_c + out_c)
                            + in_c * dim + dim * out_c + dim + out_c) * itemsize)

        out = pl.pallas_call(
            _mlp_fused_kernel,
            out_shape=jax.ShapeDtypeStruct((n_pad, out_c), x.dtype),
            grid_spec=pltpu.PrefetchScalarGridSpec(
                num_scalar_prefetch=0,
                grid=(n_pad // tm,),
                in_specs=[
                    pl.BlockSpec((tm, in_c), lambda i: (i, 0)),
                    _const_spec((in_c, dim), lambda i: (0, 0)),
                    _const_spec((1, dim), lambda i: (0, 0)),
                    _const_spec((dim, out_c), lambda i: (0, 0)),
                    _const_spec((1, out_c), lambda i: (0, 0)),
                ],
                out_specs=pl.BlockSpec((tm, out_c), lambda i: (i, 0)),
            ),
            compiler_params=pltpu.CompilerParams(
                dimension_semantics=("parallel",),
                vmem_limit_bytes=vmem_limit,
            ),
            cost_estimate=cost,
        )(x2d, w1, b1, w2, b2)
    else:
        # ------------- fallback: weights too big -> stream the hidden dim -------------
        dim_p = _round_up(dim, 128)
        if dim_p != dim:
            # TODO(synk): pre-pad once at init to avoid per-call copies in this rare
            # path; zero padding is exact (GELU(0)=0, zero W2 rows contribute 0).
            w1 = jnp.zeros((in_c, dim_p), w1.dtype).at[:, :dim].set(w1)
            b1 = jnp.zeros((1, dim_p), b1.dtype).at[:, :dim].set(b1)
            w2 = jnp.zeros((dim_p, out_c), w2.dtype).at[:dim, :].set(w2)

        # Largest dk (multiple of 128, divides dim_p) whose streamed, double-buffered
        # weight slice uses at most half the VMEM budget.
        dk = 128
        for c in range(dim_p // 128, 0, -1):
            cand = c * 128
            if dim_p % cand:
                continue
            step_w = 2 * (in_c * cand + cand * out_c + cand + out_c) * itemsize
            if step_w <= budget // 2:
                dk = cand
                break
        step_w = 2 * (in_c * dk + dk * out_c + dk + out_c) * itemsize
        per_row = 2 * (in_c + out_c) * itemsize + dk * 4 + out_c * 4
        tm = _row_tile(budget - step_w, per_row, n8)
        n_pad = _round_up(n8, tm)
        if n_pad != n:
            x2d = jnp.zeros((n_pad, in_c), x.dtype).at[:n].set(x2d)

        grid = (n_pad // tm, dim_p // dk)
        cost = pl.CostEstimate(
            flops=2 * n_pad * dim_p * (in_c + out_c),
            transcendentals=n_pad * dim_p,
            bytes_accessed=(n_pad * (in_c + out_c)
                            + grid[0] * (in_c * dim_p + dim_p * out_c + dim_p)
                            + out_c) * itemsize)

        out = pl.pallas_call(
            _mlp_ktiled_kernel,
            out_shape=jax.ShapeDtypeStruct((n_pad, out_c), x.dtype),
            grid_spec=pltpu.PrefetchScalarGridSpec(
                num_scalar_prefetch=0,
                grid=grid,
                in_specs=[
                    pl.BlockSpec((tm, in_c), lambda i, k: (i, 0)),
                    pl.BlockSpec((in_c, dk), lambda i, k: (0, k)),
                    pl.BlockSpec((1, dk), lambda i, k: (0, k)),
                    pl.BlockSpec((dk, out_c), lambda i, k: (k, 0)),
                    _const_spec((1, out_c), lambda i, k: (0, 0)),
                ],
                out_specs=pl.BlockSpec((tm, out_c), lambda i, k: (i, 0)),
                scratch_shapes=[pltpu.VMEM((tm, out_c), jnp.float32)],
            ),
            compiler_params=pltpu.CompilerParams(
                dimension_semantics=("parallel", "arbitrary"),
                vmem_limit_bytes=vmem_limit,
            ),
            cost_estimate=cost,
        )(x2d, w1, b1, w2, b2)

    if n_pad != n:
        out = out[:n]
    return out.reshape(*lead, out_c)


def init_params(key, in_channels, dim, out_channels, dtype=jnp.float32):
    """Init mimicking nn.Linear's uniform(-1/sqrt(fan_in), 1/sqrt(fan_in)).

    PyTorch stores Linear weights as (out, in); we store transposed (in, out)
    so the kernel can do x @ W directly.
    """
    k1, k2, k3, k4 = jax.random.split(key, 4)
    lim1 = 1.0 / math.sqrt(in_channels)
    lim2 = 1.0 / math.sqrt(dim)
    w1 = jax.random.uniform(k1, (in_channels, dim), dtype, -lim1, lim1)
    b1 = jax.random.uniform(k2, (1, dim), dtype, -lim1, lim1)
    w2 = jax.random.uniform(k3, (dim, out_channels), dtype, -lim2, lim2)
    b2 = jax.random.uniform(k4, (1, out_channels), dtype, -lim2, lim2)
    return w1, b1, w2, b2


if __name__ == "__main__":
    key = jax.random.PRNGKey(0)
    kx, kp = jax.random.split(key)

    batch, seq = 2, 8
    in_channels, dim, out_channels = 4, 32, 4

    x = jax.random.normal(kx, (batch, seq, in_channels), jnp.float32)
    w1, b1, w2, b2 = init_params(kp, in_channels, dim, out_channels)

    y = mlp_forward(x, w1, b1, w2, b2)
    y = jax.block_until_ready(y)

    # Sanity check against a pure-JAX reference (eval-mode dropout = identity).
    h_ref = x @ w1 + b1[0]
    h_ref = 0.5 * h_ref * (1.0 + jax.lax.erf(h_ref * _INV_SQRT2))
    y_ref = h_ref @ w2 + b2[0]
    assert y.shape == y_ref.shape, f"shape mismatch: {y.shape} vs {y_ref.shape}"
    assert jnp.allclose(y, y_ref, atol=1e-5, rtol=1e-5), "mismatch vs reference"

    print("KERNEL_OK")
</pallas_src>

<mosaic_0001>
module attributes {stable_mosaic.version = 11 : i64} {
  func.func @_mlp_fused_kernel(%arg0: i32, %arg1: memref<8x4xf32, #tpu.memory_space<vmem>>, %arg2: memref<4x32xf32, #tpu.memory_space<vmem>>, %arg3: memref<1x32xf32, #tpu.memory_space<vmem>>, %arg4: memref<32x4xf32, #tpu.memory_space<vmem>>, %arg5: memref<1x4xf32, #tpu.memory_space<vmem>>, %arg6: memref<8x4xf32, #tpu.memory_space<vmem>>) attributes {dimension_semantics = [#tpu.dimension_semantics<parallel>], iteration_bounds = array<i64: 2>, scalar_prefetch = 0 : i64, scratch_operands = 0 : i64, tpu.core_type = #tpu.core_type<tc>, window_params = [{transform_indices = @transform_0, window_bounds = array<i64: 8, 4>}, {pipeline_mode = #tpu.pipeline_mode<synchronous>, transform_indices = @transform_1, window_bounds = array<i64: 4, 32>}, {pipeline_mode = #tpu.pipeline_mode<synchronous>, transform_indices = @transform_2, window_bounds = array<i64: 1, 32>}, {pipeline_mode = #tpu.pipeline_mode<synchronous>, transform_indices = @transform_3, window_bounds = array<i64: 32, 4>}, {pipeline_mode = #tpu.pipeline_mode<synchronous>, transform_indices = @transform_4, window_bounds = array<i64: 1, 4>}, {transform_indices = @transform_5, window_bounds = array<i64: 8, 4>}]} {
    %c0 = arith.constant 0 : index
    %c0_0 = arith.constant 0 : index
    %0 = vector.load %arg1[%c0, %c0_0] : memref<8x4xf32, #tpu.memory_space<vmem>>, vector<8x4xf32>
    %c0_1 = arith.constant 0 : index
    %c0_2 = arith.constant 0 : index
    %1 = vector.load %arg2[%c0_1, %c0_2] : memref<4x32xf32, #tpu.memory_space<vmem>>, vector<4x32xf32>
    %cst = arith.constant dense<0.000000e+00> : vector<8x32xf32>
    %2 = tpu.matmul %0, %1, %cst {dimension_numbers = #tpu.dot_dimension_numbers<[1], [0], [0], [1], [0, 0, 1, 1], [], []>} : vector<8x4xf32>, vector<4x32xf32>, vector<8x32xf32> -> vector<8x32xf32>
    %c0_3 = arith.constant 0 : index
    %c0_4 = arith.constant 0 : index
    %3 = vector.load %arg3[%c0_3, %c0_4] : memref<1x32xf32, #tpu.memory_space<vmem>>, vector<1x32xf32>
    %4 = vector.broadcast %3 : vector<1x32xf32> to vector<8x32xf32>
    %5 = arith.addf %2, %4 : vector<8x32xf32>
    %cst_5 = arith.constant 5.000000e-01 : f32
    %6 = vector.broadcast %cst_5 : f32 to vector<8x32xf32>
    %7 = arith.mulf %6, %5 : vector<8x32xf32>
    %cst_6 = arith.constant 0.707106769 : f32
    %8 = vector.broadcast %cst_6 : f32 to vector<8x32xf32>
    %9 = arith.mulf %5, %8 : vector<8x32xf32>
    %10 = math.erf %9 : vector<8x32xf32>
    %cst_7 = arith.constant 1.000000e+00 : f32
    %11 = vector.broadcast %cst_7 : f32 to vector<8x32xf32>
    %12 = arith.addf %11, %10 : vector<8x32xf32>
    %13 = arith.mulf %7, %12 : vector<8x32xf32>
    %c0_8 = arith.constant 0 : index
    %c0_9 = arith.constant 0 : index
    %14 = vector.load %arg4[%c0_8, %c0_9] : memref<32x4xf32, #tpu.memory_space<vmem>>, vector<32x4xf32>
    %cst_10 = arith.constant dense<0.000000e+00> : vector<8x4xf32>
    %15 = tpu.matmul %13, %14, %cst_10 {dimension_numbers = #tpu.dot_dimension_numbers<[1], [0], [0], [1], [0, 0, 1, 1], [], []>} : vector<8x32xf32>, vector<32x4xf32>, vector<8x4xf32> -> vector<8x4xf32>
    %c0_11 = arith.constant 0 : index
    %c0_12 = arith.constant 0 : index
    %16 = vector.load %arg5[%c0_11, %c0_12] : memref<1x4xf32, #tpu.memory_space<vmem>>, vector<1x4xf32>
    %17 = vector.broadcast %16 : vector<1x4xf32> to vector<8x4xf32>
    %18 = arith.addf %15, %17 : vector<8x4xf32>
    %c0_13 = arith.constant 0 : index
    %c0_14 = arith.constant 0 : index
    %19 = vector.load %arg6[%c0_13, %c0_14] : memref<8x4xf32, #tpu.memory_space<vmem>>, vector<8x4xf32>
    tpu.vector_store %arg6[%c0_13, %c0_14], %18 {strides = array<i32>} : memref<8x4xf32, #tpu.memory_space<vmem>>, vector<8x4xf32>,
    return
  }
  func.func @transform_0(%arg0: i32) -> (i32, i32) {
    %c0_i32 = arith.constant 0 : i32
    %c0_i32_0 = arith.constant 0 : i32
    return %arg0, %c0_i32 : i32, i32
  }
  func.func @transform_1(%arg0: i32) -> (i32, i32) {
    %c0_i32 = arith.constant 0 : i32
    %c0_i32_0 = arith.constant 0 : i32
    %c0_i32_1 = arith.constant 0 : i32
    return %c0_i32, %c0_i32_0 : i32, i32
  }
  func.func @transform_2(%arg0: i32) -> (i32, i32) {
    %c0_i32 = arith.constant 0 : i32
    %c0_i32_0 = arith.constant 0 : i32
    %c0_i32_1 = arith.constant 0 : i32
    return %c0_i32, %c0_i32_0 : i32, i32
  }
  func.func @transform_3(%arg0: i32) -> (i32, i32) {
    %c0_i32 = arith.constant 0 : i32
    %c0_i32_0 = arith.constant 0 : i32
    %c0_i32_1 = arith.constant 0 : i32
    return %c0_i32, %c0_i32_0 : i32, i32
  }
  func.func @transform_4(%arg0: i32) -> (i32, i32) {
    %c0_i32 = arith.constant 0 : i32
    %c0_i32_0 = arith.constant 0 : i32
    %c0_i32_1 = arith.constant 0 : i32
    return %c0_i32, %c0_i32_0 : i32, i32
  }
  func.func @transform_5(%arg0: i32) -> (i32, i32) {
    %c0_i32 = arith.constant 0 : i32
    %c0_i32_0 = arith.constant 0 : i32
    return %arg0, %c0_i32 : i32, i32
  }
}

</mosaic_0001>

<llo_original>
// kernel: mlp_forward.1
$region0: #{mlp_forward.1}
  #allocation0 [shape = 'u32[]', space=smem, size = 0x4, offset = 0x4, fixed_abs, tag = 'smem constant byte address 0x4 - core index']
  #allocation1 [shape = 'u32[144,128]{1,0:T(1,128)}', space=vmem, size = 0x12000, scoped, tag = 'internal scratch']
  %s0 = inlined_call_operand.vmem [shape: f32[16,4], index: 0, kind: input, shape index: {}]
  %s1 = inlined_call_operand.vmem [shape: f32[4,32], index: 1, kind: input, shape index: {}]
  %s2 = inlined_call_operand.vmem [shape: f32[1,32], index: 2, kind: input, shape index: {}]
  %s3 = inlined_call_operand.vmem [shape: f32[32,4], index: 3, kind: input, shape index: {}]
  %s4 = inlined_call_operand.vmem [shape: f32[1,4], index: 4, kind: input, shape index: {}]
  %s5 = inlined_call_operand.vmem [shape: f32[16,4], index: 5, kind: output, shape index: {}]
  %s6 = sld [smem:[#allocation0]]
  $region53: #{mlp_forward.1} parent=0
    _
  %s8 = ssub.s32 1, %s6
  %s9 = scalar_select 0, %s8, %s6
  loop: start=0, step=1, limit=4
  $region2: #{mlp_forward.1} parent=0 // loop_pre_header
    _
  $region3: #{mlp_forward.1} parent=0 // loop_header
    %s11 = sphi 0, %s15
    %p12 = scmp.ge.s32.totalorder %s11, 4
    %s21 = sphi 0, %s23
    %s24 = sphi 0, %s21
    %s25 = sphi 0, %s24
    %s41 = sphi 0, %s25
    %s45 = sphi 0, %s45
    %s47 = sphi 0, %s45
    %s48 = sphi 0, %s47
    %s62 = sphi 0, %s48
    %s66 = sphi 0, %s66
    %s68 = sphi 0, %s66
    %s69 = sphi 0, %s68
    %s83 = sphi 0, %s69
    %s87 = sphi 0, %s87
    %s89 = sphi 0, %s87
    %s90 = sphi 0, %s89
    %s104 = sphi 0, %s90
    %s108 = sphi 0, %s108
    %s110 = sphi 0, %s108
    %s111 = sphi 0, %s110
    %s125 = sphi 0, %s111
    %s131 = sphi 0, %s133
    %s134 = sphi 0, %s131
    %s135 = sphi 0, %s134
    %s151 = sphi 0, %s135
  $region4: #{mlp_forward.1} parent=0 // loop_header_branch
    %14 = sbr.rel (%p12) target = $region8
  $region5: #{mlp_forward.1} parent=0 // loop_body
    %s16 = ssub.s32 %s11, 1
    %s17 = ssub.s32 %s11, 2
    %s18 = sadd.s32 %s11, 1
    %s19 = ssub.s32 %s11, %s18
    %p20 = scmp.eq.s32.totalorder %s19, 0
    %s22 = sadd.s32 %s21, 1
    %s23 = scalar_select %p20, %s21, %s22
    %p26 = pneg %p20
    %p27 = scmp.eq.s32.totalorder %s11, 1
    %p28 = por %p26, %p27
    %p29 = scmp.ne.s32.totalorder %s21, %s24
    %p30 = scmp.eq.s32.totalorder %s11, 0
    %p31 = por %p29, %p30
    %p32 = scmp.ne.s32.totalorder %s21, %s24
    %p33 = scmp.eq.s32.totalorder %s16, 1
    %p34 = por %p32, %p33
    %p35 = scmp.ne.s32.totalorder %s24, %s25
    %p36 = scmp.eq.s32.totalorder %s16, 0
    %p37 = por %p35, %p36
    %p38 = scmp.ne.s32.totalorder %s24, %s25
    %p39 = scmp.eq.s32.totalorder %s17, 1
    %p40 = por %p38, %p39
    %p42 = scmp.ne.s32.totalorder %s25, %s41
    %p43 = scmp.eq.s32.totalorder %s17, 0
    %p44 = por %p42, %p43
    %s46 = sadd.s32 %s45, 1
    %p49 = scmp.eq.s32.totalorder %s11, 1
    %p50 = scmp.ne.s32.totalorder %s45, %s47
    %p51 = scmp.eq.s32.totalorder %s11, 0
    %p52 = por %p50, %p51
    %p53 = scmp.ne.s32.totalorder %s45, %s47
    %p54 = scmp.eq.s32.totalorder %s16, 1
    %p55 = por %p53, %p54
    %p56 = scmp.ne.s32.totalorder %s47, %s48
    %p57 = scmp.eq.s32.totalorder %s16, 0
    %p58 = por %p56, %p57
    %p59 = scmp.ne.s32.totalorder %s47, %s48
    %p60 = scmp.eq.s32.totalorder %s17, 1
    %p61 = por %p59, %p60
    %p63 = scmp.ne.s32.totalorder %s48, %s62
    %p64 = scmp.eq.s32.totalorder %s17, 0
    %p65 = por %p63, %p64
    %s67 = sadd.s32 %s66, 1
    %p70 = scmp.eq.s32.totalorder %s11, 1
    %p71 = scmp.ne.s32.totalorder %s66, %s68
    %p72 = scmp.eq.s32.totalorder %s11, 0
    %p73 = por %p71, %p72
    %p74 = scmp.ne.s32.totalorder %s66, %s68
    %p75 = scmp.eq.s32.totalorder %s16, 1
    %p76 = por %p74, %p75
    %p77 = scmp.ne.s32.totalorder %s68, %s69
    %p78 = scmp.eq.s32.totalorder %s16, 0
    %p79 = por %p77, %p78
    %p80 = scmp.ne.s32.totalorder %s68, %s69
    %p81 = scmp.eq.s32.totalorder %s17, 1
    %p82 = por %p80, %p81
    %p84 = scmp.ne.s32.totalorder %s69, %s83
    %p85 = scmp.eq.s32.totalorder %s17, 0
    %p86 = por %p84, %p85
    %s88 = sadd.s32 %s87, 1
    %p91 = scmp.eq.s32.totalorder %s11, 1
    %p92 = scmp.ne.s32.totalorder %s87, %s89
    %p93 = scmp.eq.s32.totalorder %s11, 0
    %p94 = por %p92, %p93
    %p95 = scmp.ne.s32.totalorder %s87, %s89
    %p96 = scmp.eq.s32.totalorder %s16, 1
    %p97 = por %p95, %p96
    %p98 = scmp.ne.s32.totalorder %s89, %s90
    %p99 = scmp.eq.s32.totalorder %s16, 0
    %p100 = por %p98, %p99
    %p101 = scmp.ne.s32.totalorder %s89, %s90
    %p102 = scmp.eq.s32.totalorder %s17, 1
    %p103 = por %p101, %p102
    %p105 = scmp.ne.s32.totalorder %s90, %s104
    %p106 = scmp.eq.s32.totalorder %s17, 0
    %p107 = por %p105, %p106
    %s109 = sadd.s32 %s108, 1
    %p112 = scmp.eq.s32.totalorder %s11, 1
    %p113 = scmp.ne.s32.totalorder %s108, %s110
    %p114 = scmp.eq.s32.totalorder %s11, 0
    %p115 = por %p113, %p114
    %p116 = scmp.ne.s32.totalorder %s108, %s110
    %p117 = scmp.eq.s32.totalorder %s16, 1
    %p118 = por %p116, %p117
    %p119 = scmp.ne.s32.totalorder %s110, %s111
    %p120 = scmp.eq.s32.totalorder %s16, 0
    %p121 = por %p119, %p120
    %p122 = scmp.ne.s32.totalorder %s110, %s111
    %p123 = scmp.eq.s32.totalorder %s17, 1
    %p124 = por %p122, %p123
    %p126 = scmp.ne.s32.totalorder %s111, %s125
    %p127 = scmp.eq.s32.totalorder %s17, 0
    %p128 = por %p126, %p127
    %s129 = ssub.s32 %s11, %s18
    %p130 = scmp.eq.s32.totalorder %s129, 0
    %s132 = sadd.s32 %s131, 1
    %s133 = scalar_select %p130, %s131, %s132
    %p136 = pneg %p130
    %p137 = scmp.eq.s32.totalorder %s11, 1
    %p138 = por %p136, %p137
    %p139 = scmp.ne.s32.totalorder %s131, %s134
    %p140 = scmp.eq.s32.totalorder %s11, 0
    %p141 = por %p139, %p140
    %p142 = scmp.ne.s32.totalorder %s131, %s134
    %p143 = scmp.eq.s32.totalorder %s16, 1
    %p144 = por %p142, %p143
    %p145 = scmp.ne.s32.totalorder %s134, %s135
    %p146 = scmp.eq.s32.totalorder %s16, 0
    %p147 = por %p145, %p146
    %p148 = scmp.ne.s32.totalorder %s134, %s135
    %p149 = scmp.eq.s32.totalorder %s17, 1
    %p150 = por %p148, %p149
    %p152 = scmp.ne.s32.totalorder %s135, %s151
    %p153 = scmp.eq.s32.totalorder %s17, 0
    %p154 = por %p152, %p153
    %p155 = scmp.le.s32.totalorder 1, %s11
    %p156 = scmp.lt.s32.totalorder %s11, 3
    %p157 = pnand %p155, %p156
    %p158 = pneg %p157
    // Predicated region
    $region9: #{mlp_forward.1} parent=5 // pred_check
      _
    $region10: #{mlp_forward.1} parent=5 // pred_check_branch
      %160 = sbr.rel (%p157) target = $region12
    $region11: #{mlp_forward.1} parent=5 // pred_region
      %s161 = ssub.s32 %s11, 1
      // Predicated region
      $region13: #{mlp_forward.1} parent=11 // pred_check
        %p162 = pneg %p58
      $region14: #{mlp_forward.1} parent=11 // pred_check_branch
        %164 = sbr.rel (%p162) target = $region16
      $region15: #{mlp_forward.1} parent=11 // pred_region
        _
      $region16: #{mlp_forward.1} parent=11 // pred_fallthru
        _
      // Predicated region
      $region17: #{mlp_forward.1} parent=11 // pred_check
        %p165 = pneg %p79
      $region18: #{mlp_forward.1} parent=11 // pred_check_branch
        %167 = sbr.rel (%p165) target = $region20
      $region19: #{mlp_forward.1} parent=11 // pred_region
        _
      $region20: #{mlp_forward.1} parent=11 // pred_fallthru
        _
      // Predicated region
      $region21: #{mlp_forward.1} parent=11 // pred_check
        %p168 = pneg %p100
      $region22: #{mlp_forward.1} parent=11 // pred_check_branch
        %170 = sbr.rel (%p168) target = $region24
      $region23: #{mlp_forward.1} parent=11 // pred_region
        _
      $region24: #{mlp_forward.1} parent=11 // pred_fallthru
        _
      // Predicated region
      $region25: #{mlp_forward.1} parent=11 // pred_check
        %p171 = pneg %p121
      $region26: #{mlp_forward.1} parent=11 // pred_check_branch
        %173 = sbr.rel (%p171) target = $region28
      $region27: #{mlp_forward.1} parent=11 // pred_region
        _
      $region28: #{mlp_forward.1} parent=11 // pred_fallthru
        _
    $region12: #{mlp_forward.1} parent=5 // pred_fallthru
      _
    %p174 = scmp.lt.s32.totalorder %s11, 2
    // Predicated region
    $region29: #{mlp_forward.1} parent=5 // pred_check
      %p175 = pneg %p174
    $region30: #{mlp_forward.1} parent=5 // pred_check_branch
      %177 = sbr.rel (%p175) target = $region32
    $region31: #{mlp_forward.1} parent=5 // pred_region
      // Predicated region
      $region33: #{mlp_forward.1} parent=31 // pred_check
        %p178 = pneg %p31
      $region34: #{mlp_forward.1} parent=31 // pred_check_branch
        %180 = sbr.rel (%p178) target = $region36
      $region35: #{mlp_forward.1} parent=31 // pred_region
        %p181 = scmp.lt.s32.totalorder %s11, 1
        %s182 = scalar_select %p181, %s11, 1
        %s183 = smul.addr %s182, 8
        %s184 = scalar_lea.vmem %s0, %s183
      $region36: #{mlp_forward.1} parent=31 // pred_fallthru
        _
    $region32: #{mlp_forward.1} parent=5 // pred_fallthru
      _
    %p185 = scmp.le.s32.totalorder 1, %s11
    %p186 = scmp.lt.s32.totalorder %s11, 3
    %p187 = pnand %p185, %p186
    %p188 = pneg %p187
    // Predicated region
    $region37: #{mlp_forward.1} parent=5 // pred_check
      _
    $region38: #{mlp_forward.1} parent=5 // pred_check_branch
      %190 = sbr.rel (%p187) target = $region40
    $region39: #{mlp_forward.1} parent=5 // pred_region
      %s191 = ssub.s32 %s11, 1
      %p192 = scmp.lt.s32.totalorder %s16, 1
      %s193 = scalar_select %p192, %s16, 1
      %s194 = smul.addr %s193, 8
      %s195 = scalar_lea.vmem %s0, %s194
      %p196 = pneg %p37
      %p197 = pneg %p34
      %p198 = pneg %p58
      %p199 = pneg %p55
      %p200 = pneg %p79
      %p201 = pneg %p76
      %p202 = pneg %p100
      %p203 = pneg %p97
      %p204 = pneg %p121
      %p205 = pneg %p118
      %p206 = pneg %p147
      %p207 = pneg %p144
      %p208 = scmp.lt.s32.totalorder %s16, 1
      %s209 = scalar_select %p208, %s16, 1
      %s210 = smul.addr %s209, 8
      %s211 = scalar_lea.vmem %s5, %s210
      %p212 = scmp.lt.s32.totalorder %s16, 1
      %s213 = scalar_select %p212, %s16, 1
      %s214 = smul.addr %s213, 8
      %s215 = scalar_lea.vmem %s0, %s214
      %p216 = scmp.lt.s32.totalorder %s16, 1
      %s217 = scalar_select %p216, %s16, 1
      %s218 = smul.addr %s217, 8
      %s219 = scalar_lea.vmem %s5, %s218
      %v220 = vld [vmem:[%s215] sm:$0xff]
      %v221 = vld [vmem:[%s1] sm:$0xf]
      %v222 = vld [vmem:[%s2] sm:$0x1]
      %v224 = vlaneseq
      %v225 = vshrl.u32 %v224, 7
      %v226 = vsub.s32 0, %v225
      %v227 = vrot.slane %v222, %v226
      %vm229 = vcmask 31744
      %v231 = vsel %vm229, %v220, 0
      %vm233 = vcmask 1043456
      %v235 = vsel %vm233, %v221, 0
      %237 = vmatprep.subr.mxu0 0.0
      %238 = vmatpush1.msra.mxu0 %v235
      %239 = vmatprep.subr.mxu0 0.0
      %240 = vmatpush1.msra.mxu0 0.0
      %241 = vmatprep.subr.mxu0 0.0
      %242 = vmatpush1.msra.mxu0 0.0
      %243 = vmatprep.subr.mxu0 0.0
      %244 = vmatpush1.msra.mxu0 0.0
      %245 = vmatprep.subr.mxu0 0.0
      %246 = vmatpush1.msra.mxu0 0.0
      %247 = vmatprep.subr.mxu0 0.0
      %248 = vmatpush1.msra.mxu0 0.0
      %249 = vmatprep.subr.mxu0 0.0
      %250 = vmatpush1.msra.mxu0 0.0
      %251 = vmatprep.subr.mxu0 0.0
      %252 = vmatpush1.msra.mxu0 0.0
      %253 = vmatprep.subr.mxu0 0.0
      %254 = vmatpush1.msra.mxu0 0.0
      %255 = vmatprep.subr.mxu0 0.0
      %256 = vmatpush1.msra.mxu0 0.0
      %257 = vmatprep.subr.mxu0 0.0
      %258 = vmatpush1.msra.mxu0 0.0
      %259 = vmatprep.subr.mxu0 0.0
      %260 = vmatpush1.msra.mxu0 0.0
      %261 = vmatprep.subr.mxu0 0.0
      %262 = vmatpush1.msra.mxu0 0.0
      %263 = vmatprep.subr.mxu0 0.0
      %264 = vmatpush1.msra.mxu0 0.0
      %265 = vmatprep.subr.mxu0 0.0
      %266 = vmatpush1.msra.mxu0 0.0
      %267 = vmatprep.subr.mxu0 0.0
      %268 = vmatpush1.msra.mxu0 0.0
      %269 = vmatprep.subr.mxu0 0.0
      %270 = vmatpush1.msra.mxu0 0.0
      %271 = vmatprep.subr.mxu0 0.0
      %272 = vmatpush1.msra.mxu0 0.0
      %273 = vmatprep.subr.mxu0 0.0
      %274 = vmatpush1.msra.mxu0 0.0
      %275 = vmatprep.subr.mxu0 0.0
      %276 = vmatpush1.msra.mxu0 0.0
      %277 = vmatprep.subr.mxu0 0.0
      %278 = vmatpush1.msra.mxu0 0.0
      %279 = vmatprep.subr.mxu0 0.0
      %280 = vmatpush1.msra.mxu0 0.0
      %281 = vmatprep.subr.mxu0 0.0
      %282 = vmatpush1.msra.mxu0 0.0
      %283 = vmatprep.subr.mxu0 0.0
      %284 = vmatpush1.msra.mxu0 0.0
      %285 = vmatprep.subr.mxu0 0.0
      %286 = vmatpush1.msra.mxu0 0.0
      %287 = vmatprep.subr.mxu0 0.0
      %288 = vmatpush1.msra.mxu0 0.0
      %289 = vmatprep.subr.mxu0 0.0
      %290 = vmatpush1.msra.mxu0 0.0
      %291 = vmatprep.subr.mxu0 0.0
      %292 = vmatpush1.msra.mxu0 0.0
      %293 = vmatprep.subr.mxu0 0.0
      %294 = vmatpush1.msra.mxu0 0.0
      %295 = vmatprep.subr.mxu0 0.0
      %296 = vmatpush1.msra.mxu0 0.0
      %297 = vmatprep.subr.mxu0 0.0
      %298 = vmatpush1.msra.mxu0 0.0
      %299 = vmatprep.subr.mxu0 0.0
      %300 = vmatpush1.msra.mxu0 0.0
      %301 = vmatprep.mubr.f32.mxu0 0.0
      %302 = vmatmul.mubr.f32.gmra.mrb[0].mxu0 %v231
      %v303 = vpop.f32.mrb[0].mxu0
      %v304 = vadd.f32 %v227, %v303
      %v305 = vpop.f32.mrb[0].mxu0
      %306 = vdwg.mxu0
      %v307 = vmul.f32 %v304, 0.5
      %v308 = vmul.f32 %v304, 0.70710677
      %v309 = verf.f32.pop %v308
      %v310 = vadd.f32 %v309, 1.0
      %v311 = vmul.f32 %v307, %v310
      %v312 = vld [vmem:[%s3] sm:$0xff]
      %v313 = vld [vmem:[%s3 + $0x8] sm:$0xff]
      %v314 = vld [vmem:[%s3 + $0x10] sm:$0xff]
      %v315 = vld [vmem:[%s3 + $0x18] sm:$0xff]
      %v316 = vld [vmem:[%s4] sm:$0x1]
      %v318 = vlaneseq
      %v319 = vshrl.u32 %v318, 7
      %v320 = vsub.s32 0, %v319
      %v321 = vrot.slane %v316, %v320
      %vm323 = vcmask 261120
      %v325 = vsel %vm323, %v311, 0
      %327 = vmatprep.subr.mxu0 0.0
      %328 = vmatpush1.msra.mxu0 %v312
      %329 = vmatprep.subr.mxu0 0.0
      %330 = vmatpush1.msra.mxu0 %v313
      %331 = vmatprep.subr.mxu0 0.0
      %332 = vmatpush1.msra.mxu0 %v314
      %333 = vmatprep.subr.mxu0 0.0
      %334 = vmatpush1.msra.mxu0 %v315
      %335 = vmatprep.subr.mxu0 0.0
      %336 = vmatpush1.msra.mxu0 0.0
      %337 = vmatprep.subr.mxu0 0.0
      %338 = vmatpush1.msra.mxu0 0.0
      %339 = vmatprep.subr.mxu0 0.0
      %340 = vmatpush1.msra.mxu0 0.0
      %341 = vmatprep.subr.mxu0 0.0
      %342 = vmatpush1.msra.mxu0 0.0
      %343 = vmatprep.subr.mxu0 0.0
      %344 = vmatpush1.msra.mxu0 0.0
      %345 = vmatprep.subr.mxu0 0.0
      %346 = vmatpush1.msra.mxu0 0.0
      %347 = vmatprep.subr.mxu0 0.0
      %348 = vmatpush1.msra.mxu0 0.0
      %349 = vmatprep.subr.mxu0 0.0
      %350 = vmatpush1.msra.mxu0 0.0
      %351 = vmatprep.subr.mxu0 0.0
      %352 = vmatpush1.msra.mxu0 0.0
      %353 = vmatprep.subr.mxu0 0.0
      %354 = vmatpush1.msra.mxu0 0.0
      %355 = vmatprep.subr.mxu0 0.0
      %356 = vmatpush1.msra.mxu0 0.0
      %357 = vmatprep.subr.mxu0 0.0
      %358 = vmatpush1.msra.mxu0 0.0
      %359 = vmatprep.subr.mxu0 0.0
      %360 = vmatpush1.msra.mxu0 0.0
      %361 = vmatprep.subr.mxu0 0.0
      %362 = vmatpush1.msra.mxu0 0.0
      %363 = vmatprep.subr.mxu0 0.0
      %364 = vmatpush1.msra.mxu0 0.0
      %365 = vmatprep.subr.mxu0 0.0
      %366 = vmatpush1.msra.mxu0 0.0
      %367 = vmatprep.subr.mxu0 0.0
      %368 = vmatpush1.msra.mxu0 0.0
      %369 = vmatprep.subr.mxu0 0.0
      %370 = vmatpush1.msra.mxu0 0.0
      %371 = vmatprep.subr.mxu0 0.0
      %372 = vmatpush1.msra.mxu0 0.0
      %373 = vmatprep.subr.mxu0 0.0
      %374 = vmatpush1.msra.mxu0 0.0
      %375 = vmatprep.subr.mxu0 0.0
      %376 = vmatpush1.msra.mxu0 0.0
      %377 = vmatprep.subr.mxu0 0.0
      %378 = vmatpush1.msra.mxu0 0.0
      %379 = vmatprep.subr.mxu0 0.0
      %380 = vmatpush1.msra.mxu0 0.0
      %381 = vmatprep.subr.mxu0 0.0
      %382 = vmatpush1.msra.mxu0 0.0
      %383 = vmatprep.subr.mxu0 0.0
      %384 = vmatpush1.msra.mxu0 0.0
      %385 = vmatprep.subr.mxu0 0.0
      %386 = vmatpush1.msra.mxu0 0.0
      %387 = vmatprep.subr.mxu0 0.0
      %388 = vmatpush1.msra.mxu0 0.0
      %389 = vmatprep.subr.mxu0 0.0
      %390 = vmatpush1.msra.mxu0 0.0
      %391 = vmatprep.mubr.f32.mxu0 0.0
      %392 = vmatmul.mubr.f32.gmra.mrb[0].mxu0 %v325
      %v393 = vpop.f32.mrb[0].mxu0
      %v394 = vadd.f32 %v321, %v393
      %v395 = vpop.f32.mrb[0].mxu0
      %396 = vdwg.mxu0
      %397 = vst.msk [vmem:[%s219] sm:$0xff] %vm229, %v394
      %p398 = scmp.lt.s32.totalorder %s16, 1
      %s399 = scalar_select %p398, %s16, 1
      %s400 = smul.addr %s399, 8
      %s401 = scalar_lea.vmem %s5, %s400
      // Predicated region
      $region41: #{mlp_forward.1} parent=39 // pred_check
        %p402 = pneg %p144
      $region42: #{mlp_forward.1} parent=39 // pred_check_branch
        %404 = sbr.rel (%p402) target = $region44
      $region43: #{mlp_forward.1} parent=39 // pred_region
        _
      $region44: #{mlp_forward.1} parent=39 // pred_fallthru
        _
    $region40: #{mlp_forward.1} parent=5 // pred_fallthru
      _
    %p405 = scmp.le.s32.totalorder 2, %s11
    // Predicated region
    $region45: #{mlp_forward.1} parent=5 // pred_check
      %p406 = pneg %p405
    $region46: #{mlp_forward.1} parent=5 // pred_check_branch
      %408 = sbr.rel (%p406) target = $region48
    $region47: #{mlp_forward.1} parent=5 // pred_region
      %s409 = ssub.s32 %s11, 2
      // Predicated region
      $region49: #{mlp_forward.1} parent=47 // pred_check
        %p410 = pneg %p150
      $region50: #{mlp_forward.1} parent=47 // pred_check_branch
        %412 = sbr.rel (%p410) target = $region52
      $region51: #{mlp_forward.1} parent=47 // pred_region
        %p413 = scmp.lt.s32.totalorder %s17, 1
        %s414 = scalar_select %p413, %s17, 1
        %s415 = smul.addr %s414, 8
        %s416 = scalar_lea.vmem %s5, %s415
      $region52: #{mlp_forward.1} parent=47 // pred_fallthru
        _
    $region48: #{mlp_forward.1} parent=5 // pred_fallthru
      _
  $region6: #{mlp_forward.1} parent=0 // loop_footer
    %s15 = sadd.s32 1, %s11
  $region7: #{mlp_forward.1} parent=0 // loop_footer_branch
    %10 = sbr.rel target = $region3
  $region8: #{mlp_forward.1} parent=0 // loop_exit
    _

</llo_original>
